<compile_context>
chip_gen: v5e
topology: v5e:2x2
jax: 0.10.0
libtpu: 0.0.40
codegen_flags: <defaults>
</compile_context>

<pallas_src>
import functools

import jax
import jax.numpy as jnp
from jax.experimental import pallas as pl
from jax.experimental.pallas import tpu as pltpu


def _round_up(x, m):
    return ((x + m - 1) // m) * m


def _dsc_kernel(x_ref, dww_ref, mask_ref, pww_ref, pwb_ref, o_ref, xpad_ref, *,
                lead, hw, tap_starts, kw_of_tap, n_images, c_in, use_mxu):
    # x_ref   : (N*C_in, H*W)    all images; (image,channel) packed on sublanes
    # dww_ref : (K*K, N*C_in, 1) per-tap depthwise weight (tiled over images)
    # mask_ref: (K, NQp)         per-kw column-validity mask (tiny)
    # pww_ref : (C_out, C_in)    pointwise weights
    # pwb_ref : (C_out, 1)       effective pointwise bias (= pw_bias + pww @ dw_bias)
    # o_ref   : (N*C_out, NQp)   lane-dense output slab, NQp = round_up(H1*W, 128)
    # xpad_ref: (N*C_in, L)      zero-padded flat scratch (fused padding)
    NC, L = xpad_ref.shape
    C_out = pww_ref.shape[0]
    NQp = o_ref.shape[-1]
    K = mask_ref.shape[0]

    # Fused zero padding: only the halo regions are cleared; the image copy covers the rest.
    if lead > 0:
        xpad_ref[:, pl.ds(0, lead)] = jnp.zeros((NC, lead), jnp.float32)
    tail = L - (lead + hw)
    if tail > 0:
        xpad_ref[:, pl.ds(lead + hw, tail)] = jnp.zeros((NC, tail), jnp.float32)
    xpad_ref[:, pl.ds(lead, hw)] = x_ref[...].astype(jnp.float32)

    # Hoist the K mask rows (reused across taps sharing the same kw).
    mask_rows = [mask_ref[kw:kw + 1, :] for kw in range(K)]

    # Depthwise conv: one contiguous shifted window + 2 VPU muls per tap (statically
    # unrolled).  The accumulator is seeded from tap 0 (no zeros materialization).
    acc = None
    for t, start in enumerate(tap_starts):
        window = xpad_ref[:, pl.ds(start, NQp)]           # contiguous, stride-1 load
        contrib = window * mask_rows[kw_of_tap[t]] * dww_ref[t]
        acc = contrib if acc is None else acc + contrib   # (N*C_in, NQp)

    # Pointwise 1x1 conv, per image over the packed sublane axis.
    pw = pww_ref[...].astype(jnp.float32)
    pwb = pwb_ref[...].astype(jnp.float32)
    for n in range(n_images):
        acc_n = acc[n * c_in:(n + 1) * c_in, :]           # static sublane slice
        if use_mxu:
            out_n = jnp.dot(pw, acc_n, preferred_element_type=jnp.float32) + pwb
        else:
            out_n = jnp.broadcast_to(pwb, (C_out, NQp))   # bias seeds the accumulator
            for c in range(c_in):                         # C_in broadcast FMAs on the VPU
                out_n = out_n + pw[:, c:c + 1] * acc_n[c:c + 1, :]
        o_ref[n * C_out:(n + 1) * C_out, :] = out_n.astype(o_ref.dtype)


@functools.partial(jax.jit,
                   static_argnames=("kernel_size", "padding", "stride", "dilation"))
def depthwise_separable_conv(x_nchw, dw_weight, dw_bias, pw_weight, pw_bias,
                             *, kernel_size, padding, stride=1, dilation=1):
    """Matches DepthwiseSeparableConv.forward for NCHW inputs.

    dw_weight: (C_in, 1, K, K), dw_bias: (C_in,),
    pw_weight: (C_out, C_in, 1, 1), pw_bias: (C_out,)
    """
    N, C_in, H, W = x_nchw.shape
    C_out = pw_weight.shape[0]
    K, pad, d, s = kernel_size, padding, dilation, stride

    H_out = (H + 2 * pad - d * (K - 1) - 1) // s + 1
    W_out = (W + 2 * pad - d * (K - 1) - 1) // s + 1
    H1 = H + 2 * pad - d * (K - 1)          # stride-1 (wide) output height
    if H1 < 1 or (W_out - 1) * s >= W:
        # TODO(synk): over-padded convs whose output columns exceed the input row width
        # would need a wider internal row; never hit by 'same' / valid configurations.
        raise NotImplementedError("padding so large that W_out*stride > W is unsupported")

    HW = H * W
    NQ = H1 * W                             # stride-1 flat output length
    NQp = _round_up(NQ, 128)                # lane-dense (unmasked vst) output width
    lead = _round_up(pad * (W + 1), 128)    # >= pad*(W+1), lane-aligned image start

    # Static per-tap start offsets into the padded flat scratch (always contiguous windows;
    # stride>1 is handled by decimating the wide result in the wrapper, never by
    # lane-strided loads).
    tap_starts, kw_of_tap = [], []
    for kh in range(K):
        for kw in range(K):
            tap_starts.append(lead + (kh * d - pad) * W + (kw * d - pad))
            kw_of_tap.append(kw)
    L = _round_up(max(lead + HW, max(tap_starts) + NQp), 128)

    # Tiny per-kw column-validity masks (K x NQp floats), instead of a K^2-inflated
    # pre-broadcast coefficient tensor.
    q = jnp.arange(NQp)
    col_in_row = q % W
    masks = []
    for kw in range(K):
        col = col_in_row + kw * d - pad
        masks.append(((col >= 0) & (col < W) & (q < NQ)).astype(jnp.float32))
    mask = jnp.stack(masks, axis=0)                                   # (K, NQp)

    # Depthwise weights per tap, tiled across the N images packed on sublanes.
    dww = dw_weight[:, 0, :, :].astype(jnp.float32)                   # (C_in, K, K)
    dww = dww.transpose(1, 2, 0).reshape(K * K, C_in)                 # (K*K, C_in)
    dww = jnp.tile(dww, (1, N)).reshape(K * K, N * C_in, 1)           # (K*K, N*C_in, 1)

    pww = pw_weight[:, :, 0, 0].astype(jnp.float32)                   # (C_out, C_in)
    # Fold the depthwise bias into the pointwise bias: pww @ (dw + dwb) + pwb
    #   == pww @ dw + (pww @ dwb + pwb).
    pwb_eff = (pw_bias.astype(jnp.float32)
               + pww @ dw_bias.astype(jnp.float32)).reshape(C_out, 1)

    x_flat = x_nchw.reshape(N * C_in, HW)                             # free reshape

    kernel = functools.partial(
        _dsc_kernel, lead=lead, hw=HW,
        tap_starts=tuple(tap_starts), kw_of_tap=tuple(kw_of_tap),
        n_images=N, c_in=C_in, use_mxu=(C_in >= 8))

    out_flat = pl.pallas_call(
        kernel,
        out_shape=jax.ShapeDtypeStruct((N * C_out, NQp), x_nchw.dtype),
        grid_spec=pltpu.PrefetchScalarGridSpec(
            num_scalar_prefetch=0,
            grid=(1,),        # whole (tiny) problem in one step: no per-step overhead
            in_specs=[
                pl.BlockSpec((N * C_in, HW), lambda i: (0, 0)),
                pl.BlockSpec((K * K, N * C_in, 1), lambda i: (0, 0, 0)),
                pl.BlockSpec((K, NQp), lambda i: (0, 0)),
                pl.BlockSpec((C_out, C_in), lambda i: (0, 0)),
                pl.BlockSpec((C_out, 1), lambda i: (0, 0)),
            ],
            out_specs=pl.BlockSpec((N * C_out, NQp), lambda i: (0, 0)),
            scratch_shapes=[pltpu.VMEM((N * C_in, L), jnp.float32)],
        ),
        compiler_params=pltpu.CompilerParams(
            dimension_semantics=("arbitrary",)),
    )(x_flat, dww, mask, pww, pwb_eff)

    # (N*C_out, NQp) -> NCHW.  Slices are no-ops for stride-1 'same' convs.
    out = out_flat.reshape(N, C_out, NQp)[:, :, :NQ].reshape(N, C_out, H1, W)
    if s > 1:
        out = out[:, :, ::s, ::s]
    return out[:, :, :H_out, :W_out]


def _reference(x, dw_w, dw_b, pw_w, pw_b, *, pad, stride, dilation):
    """Plain-JAX (lax.conv) reference, NCHW — mirrors the PyTorch module."""
    C_in = x.shape[1]
    dw = jax.lax.conv_general_dilated(
        x, dw_w, window_strides=(stride, stride),
        padding=[(pad, pad), (pad, pad)],
        rhs_dilation=(dilation, dilation),
        dimension_numbers=("NCHW", "OIHW", "NCHW"),
        feature_group_count=C_in) + dw_b.reshape(1, -1, 1, 1)
    pw = jax.lax.conv_general_dilated(
        dw, pw_w, window_strides=(1, 1), padding="VALID",
        dimension_numbers=("NCHW", "OIHW", "NCHW")) + pw_b.reshape(1, -1, 1, 1)
    return pw


if __name__ == "__main__":
    # Module config (matches DepthwiseSeparableConv(input_size=16, 4, 8, 3, 'same')):
    input_size = 16
    n_channels_in = 4
    n_channels_out = 8
    kernel_size = 3
    stride = 1
    dilation = 1
    # padding == 'same' branch of __init__:
    padding = int(0.5 * ((input_size - 1) * stride - input_size
                         + kernel_size + (kernel_size - 1) * (dilation - 1)))

    key = jax.random.PRNGKey(0)
    k_x, k_dw, k_dwb, k_pw, k_pwb = jax.random.split(key, 5)

    x = jax.random.normal(k_x, (2, n_channels_in, input_size, input_size),
                          dtype=jnp.float32)
    dw_weight = jax.random.normal(
        k_dw, (n_channels_in, 1, kernel_size, kernel_size), dtype=jnp.float32) * 0.1
    dw_bias = jax.random.normal(k_dwb, (n_channels_in,), dtype=jnp.float32) * 0.1
    pw_weight = jax.random.normal(
        k_pw, (n_channels_out, n_channels_in, 1, 1), dtype=jnp.float32) * 0.1
    pw_bias = jax.random.normal(k_pwb, (n_channels_out,), dtype=jnp.float32) * 0.1

    out = depthwise_separable_conv(
        x, dw_weight, dw_bias, pw_weight, pw_bias,
        kernel_size=kernel_size, padding=padding,
        stride=stride, dilation=dilation)
    out = jax.block_until_ready(out)

    ref = _reference(x, dw_weight, dw_bias, pw_weight, pw_bias,
                     pad=padding, stride=stride, dilation=dilation)
    assert out.shape == ref.shape, (out.shape, ref.shape)
    assert jnp.allclose(out, ref, atol=1e-4, rtol=1e-4), "mismatch vs reference"

    print("KERNEL_OK")
</pallas_src>

<mosaic_0001>
module attributes {stable_mosaic.version = 11 : i64} {
  func.func @_dsc_kernel(%arg0: i32, %arg1: memref<8x256xf32, #tpu.memory_space<vmem>>, %arg2: memref<9x8x1xf32, #tpu.memory_space<vmem>>, %arg3: memref<3x256xf32, #tpu.memory_space<vmem>>, %arg4: memref<8x4xf32, #tpu.memory_space<vmem>>, %arg5: memref<8x1xf32, #tpu.memory_space<vmem>>, %arg6: memref<16x256xf32, #tpu.memory_space<vmem>>, %arg7: memref<8x512xf32, #tpu.memory_space<vmem>>) attributes {dimension_semantics = [#tpu.dimension_semantics<arbitrary>], iteration_bounds = array<i64: 1>, scalar_prefetch = 0 : i64, scratch_operands = 1 : i64, tpu.core_type = #tpu.core_type<tc>, window_params = [{pipeline_mode = #tpu.pipeline_mode<synchronous>, transform_indices = @transform_0, window_bounds = array<i64: 8, 256>}, {pipeline_mode = #tpu.pipeline_mode<synchronous>, transform_indices = @transform_1, window_bounds = array<i64: 9, 8, 1>}, {pipeline_mode = #tpu.pipeline_mode<synchronous>, transform_indices = @transform_2, window_bounds = array<i64: 3, 256>}, {pipeline_mode = #tpu.pipeline_mode<synchronous>, transform_indices = @transform_3, window_bounds = array<i64: 8, 4>}, {pipeline_mode = #tpu.pipeline_mode<synchronous>, transform_indices = @transform_4, window_bounds = array<i64: 8, 1>}, {pipeline_mode = #tpu.pipeline_mode<synchronous>, transform_indices = @transform_5, window_bounds = array<i64: 16, 256>}]} {
    %cst = arith.constant 0.000000e+00 : f32
    %0 = vector.broadcast %cst : f32 to vector<8x128xf32>
    %c0 = arith.constant 0 : index
    %c0_0 = arith.constant 0 : index
    %1 = vector.load %arg7[%c0, %c0_0] : memref<8x512xf32, #tpu.memory_space<vmem>>, vector<8x128xf32>
    tpu.vector_store %arg7[%c0, %c0_0], %0 {strides = array<i32>} : memref<8x512xf32, #tpu.memory_space<vmem>>, vector<8x128xf32>,
    %cst_1 = arith.constant 0.000000e+00 : f32
    %2 = vector.broadcast %cst_1 : f32 to vector<8x128xf32>
    %c0_2 = arith.constant 0 : index
    %c384 = arith.constant 384 : index
    %3 = vector.load %arg7[%c0_2, %c384] : memref<8x512xf32, #tpu.memory_space<vmem>>, vector<8x128xf32>
    tpu.vector_store %arg7[%c0_2, %c384], %2 {strides = array<i32>} : memref<8x512xf32, #tpu.memory_space<vmem>>, vector<8x128xf32>,
    %c0_3 = arith.constant 0 : index
    %c0_4 = arith.constant 0 : index
    %4 = vector.load %arg1[%c0_3, %c0_4] : memref<8x256xf32, #tpu.memory_space<vmem>>, vector<8x256xf32>
    %c0_5 = arith.constant 0 : index
    %c128 = arith.constant 128 : index
    %5 = vector.load %arg7[%c0_5, %c128] : memref<8x512xf32, #tpu.memory_space<vmem>>, vector<8x256xf32>
    tpu.vector_store %arg7[%c0_5, %c128], %4 {strides = array<i32>} : memref<8x512xf32, #tpu.memory_space<vmem>>, vector<8x256xf32>,
    %c0_6 = arith.constant 0 : index
    %c0_7 = arith.constant 0 : index
    %6 = vector.load %arg3[%c0_6, %c0_7] : memref<3x256xf32, #tpu.memory_space<vmem>>, vector<1x256xf32>
    %c1 = arith.constant 1 : index
    %c0_8 = arith.constant 0 : index
    %7 = vector.load %arg3[%c1, %c0_8] : memref<3x256xf32, #tpu.memory_space<vmem>>, vector<1x256xf32>
    %c2 = arith.constant 2 : index
    %c0_9 = arith.constant 0 : index
    %8 = vector.load %arg3[%c2, %c0_9] : memref<3x256xf32, #tpu.memory_space<vmem>>, vector<1x256xf32>
    %c0_10 = arith.constant 0 : index
    %c111 = arith.constant 111 : index
    %9 = vector.load %arg7[%c0_10, %c111] : memref<8x512xf32, #tpu.memory_space<vmem>>, vector<8x256xf32>
    %10 = vector.broadcast %6 : vector<1x256xf32> to vector<8x256xf32>
    %11 = arith.mulf %9, %10 : vector<8x256xf32>
    %c0_11 = arith.constant 0 : index
    %c0_12 = arith.constant 0 : index
    %c0_13 = arith.constant 0 : index
    %12 = vector.load %arg2[%c0_11, %c0_12, %c0_13] : memref<9x8x1xf32, #tpu.memory_space<vmem>>, vector<1x8x1xf32>
    %13 = vector.shape_cast %12 : vector<1x8x1xf32> to vector<8x1xf32>
    %14 = vector.broadcast %13 : vector<8x1xf32> to vector<8x256xf32>
    %15 = arith.mulf %11, %14 : vector<8x256xf32>
    %c0_14 = arith.constant 0 : index
    %c112 = arith.constant 112 : index
    %16 = vector.load %arg7[%c0_14, %c112] : memref<8x512xf32, #tpu.memory_space<vmem>>, vector<8x256xf32>
    %17 = vector.broadcast %7 : vector<1x256xf32> to vector<8x256xf32>
    %18 = arith.mulf %16, %17 : vector<8x256xf32>
    %c1_15 = arith.constant 1 : index
    %c0_16 = arith.constant 0 : index
    %c0_17 = arith.constant 0 : index
    %19 = vector.load %arg2[%c1_15, %c0_16, %c0_17] : memref<9x8x1xf32, #tpu.memory_space<vmem>>, vector<1x8x1xf32>
    %20 = vector.shape_cast %19 : vector<1x8x1xf32> to vector<8x1xf32>
    %21 = vector.broadcast %20 : vector<8x1xf32> to vector<8x256xf32>
    %22 = arith.mulf %18, %21 : vector<8x256xf32>
    %23 = arith.addf %15, %22 : vector<8x256xf32>
    %c0_18 = arith.constant 0 : index
    %c113 = arith.constant 113 : index
    %24 = vector.load %arg7[%c0_18, %c113] : memref<8x512xf32, #tpu.memory_space<vmem>>, vector<8x256xf32>
    %25 = vector.broadcast %8 : vector<1x256xf32> to vector<8x256xf32>
    %26 = arith.mulf %24, %25 : vector<8x256xf32>
    %c2_19 = arith.constant 2 : index
    %c0_20 = arith.constant 0 : index
    %c0_21 = arith.constant 0 : index
    %27 = vector.load %arg2[%c2_19, %c0_20, %c0_21] : memref<9x8x1xf32, #tpu.memory_space<vmem>>, vector<1x8x1xf32>
    %28 = vector.shape_cast %27 : vector<1x8x1xf32> to vector<8x1xf32>
    %29 = vector.broadcast %28 : vector<8x1xf32> to vector<8x256xf32>
    %30 = arith.mulf %26, %29 : vector<8x256xf32>
    %31 = arith.addf %23, %30 : vector<8x256xf32>
    %c0_22 = arith.constant 0 : index
    %c127 = arith.constant 127 : index
    %32 = vector.load %arg7[%c0_22, %c127] : memref<8x512xf32, #tpu.memory_space<vmem>>, vector<8x256xf32>
    %33 = vector.broadcast %6 : vector<1x256xf32> to vector<8x256xf32>
    %34 = arith.mulf %32, %33 : vector<8x256xf32>
    %c3 = arith.constant 3 : index
    %c0_23 = arith.constant 0 : index
    %c0_24 = arith.constant 0 : index
    %35 = vector.load %arg2[%c3, %c0_23, %c0_24] : memref<9x8x1xf32, #tpu.memory_space<vmem>>, vector<1x8x1xf32>
    %36 = vector.shape_cast %35 : vector<1x8x1xf32> to vector<8x1xf32>
    %37 = vector.broadcast %36 : vector<8x1xf32> to vector<8x256xf32>
    %38 = arith.mulf %34, %37 : vector<8x256xf32>
    %39 = arith.addf %31, %38 : vector<8x256xf32>
    %c0_25 = arith.constant 0 : index
    %c128_26 = arith.constant 128 : index
    %40 = vector.load %arg7[%c0_25, %c128_26] : memref<8x512xf32, #tpu.memory_space<vmem>>, vector<8x256xf32>
    %41 = vector.broadcast %7 : vector<1x256xf32> to vector<8x256xf32>
    %42 = arith.mulf %40, %41 : vector<8x256xf32>
    %c4 = arith.constant 4 : index
    %c0_27 = arith.constant 0 : index
    %c0_28 = arith.constant 0 : index
    %43 = vector.load %arg2[%c4, %c0_27, %c0_28] : memref<9x8x1xf32, #tpu.memory_space<vmem>>, vector<1x8x1xf32>
    %44 = vector.shape_cast %43 : vector<1x8x1xf32> to vector<8x1xf32>
    %45 = vector.broadcast %44 : vector<8x1xf32> to vector<8x256xf32>
    %46 = arith.mulf %42, %45 : vector<8x256xf32>
    %47 = arith.addf %39, %46 : vector<8x256xf32>
    %c0_29 = arith.constant 0 : index
    %c129 = arith.constant 129 : index
    %48 = vector.load %arg7[%c0_29, %c129] : memref<8x512xf32, #tpu.memory_space<vmem>>, vector<8x256xf32>
    %49 = vector.broadcast %8 : vector<1x256xf32> to vector<8x256xf32>
    %50 = arith.mulf %48, %49 : vector<8x256xf32>
    %c5 = arith.constant 5 : index
    %c0_30 = arith.constant 0 : index
    %c0_31 = arith.constant 0 : index
    %51 = vector.load %arg2[%c5, %c0_30, %c0_31] : memref<9x8x1xf32, #tpu.memory_space<vmem>>, vector<1x8x1xf32>
    %52 = vector.shape_cast %51 : vector<1x8x1xf32> to vector<8x1xf32>
    %53 = vector.broadcast %52 : vector<8x1xf32> to vector<8x256xf32>
    %54 = arith.mulf %50, %53 : vector<8x256xf32>
    %55 = arith.addf %47, %54 : vector<8x256xf32>
    %c0_32 = arith.constant 0 : index
    %c143 = arith.constant 143 : index
    %56 = vector.load %arg7[%c0_32, %c143] : memref<8x512xf32, #tpu.memory_space<vmem>>, vector<8x256xf32>
    %57 = vector.broadcast %6 : vector<1x256xf32> to vector<8x256xf32>
    %58 = arith.mulf %56, %57 : vector<8x256xf32>
    %c6 = arith.constant 6 : index
    %c0_33 = arith.constant 0 : index
    %c0_34 = arith.constant 0 : index
    %59 = vector.load %arg2[%c6, %c0_33, %c0_34] : memref<9x8x1xf32, #tpu.memory_space<vmem>>, vector<1x8x1xf32>
    %60 = vector.shape_cast %59 : vector<1x8x1xf32> to vector<8x1xf32>
    %61 = vector.broadcast %60 : vector<8x1xf32> to vector<8x256xf32>
    %62 = arith.mulf %58, %61 : vector<8x256xf32>
    %63 = arith.addf %55, %62 : vector<8x256xf32>
    %c0_35 = arith.constant 0 : index
    %c144 = arith.constant 144 : index
    %64 = vector.load %arg7[%c0_35, %c144] : memref<8x512xf32, #tpu.memory_space<vmem>>, vector<8x256xf32>
    %65 = vector.broadcast %7 : vector<1x256xf32> to vector<8x256xf32>
    %66 = arith.mulf %64, %65 : vector<8x256xf32>
    %c7 = arith.constant 7 : index
    %c0_36 = arith.constant 0 : index
    %c0_37 = arith.constant 0 : index
    %67 = vector.load %arg2[%c7, %c0_36, %c0_37] : memref<9x8x1xf32, #tpu.memory_space<vmem>>, vector<1x8x1xf32>
    %68 = vector.shape_cast %67 : vector<1x8x1xf32> to vector<8x1xf32>
    %69 = vector.broadcast %68 : vector<8x1xf32> to vector<8x256xf32>
    %70 = arith.mulf %66, %69 : vector<8x256xf32>
    %71 = arith.addf %63, %70 : vector<8x256xf32>
    %c0_38 = arith.constant 0 : index
    %c145 = arith.constant 145 : index
    %72 = vector.load %arg7[%c0_38, %c145] : memref<8x512xf32, #tpu.memory_space<vmem>>, vector<8x256xf32>
    %73 = vector.broadcast %8 : vector<1x256xf32> to vector<8x256xf32>
    %74 = arith.mulf %72, %73 : vector<8x256xf32>
    %c8 = arith.constant 8 : index
    %c0_39 = arith.constant 0 : index
    %c0_40 = arith.constant 0 : index
    %75 = vector.load %arg2[%c8, %c0_39, %c0_40] : memref<9x8x1xf32, #tpu.memory_space<vmem>>, vector<1x8x1xf32>
    %76 = vector.shape_cast %75 : vector<1x8x1xf32> to vector<8x1xf32>
    %77 = vector.broadcast %76 : vector<8x1xf32> to vector<8x256xf32>
    %78 = arith.mulf %74, %77 : vector<8x256xf32>
    %79 = arith.addf %71, %78 : vector<8x256xf32>
    %c0_41 = arith.constant 0 : index
    %c0_42 = arith.constant 0 : index
    %80 = vector.load %arg4[%c0_41, %c0_42] : memref<8x4xf32, #tpu.memory_space<vmem>>, vector<8x4xf32>
    %c0_43 = arith.constant 0 : index
    %c0_44 = arith.constant 0 : index
    %81 = vector.load %arg5[%c0_43, %c0_44] : memref<8x1xf32, #tpu.memory_space<vmem>>, vector<8x1xf32>
    %82 = vector.extract_strided_slice %79 {offsets = [0, 0], sizes = [4, 256], strides = [1, 1]} : vector<8x256xf32> to vector<4x256xf32>
    %83 = vector.shape_cast %81 : vector<8x1xf32> to vector<8x1xf32>
    %84 = vector.broadcast %83 : vector<8x1xf32> to vector<8x256xf32>
    %85 = vector.extract_strided_slice %80 {offsets = [0, 0], sizes = [8, 1], strides = [1, 1]} : vector<8x4xf32> to vector<8x1xf32>
    %86 = vector.extract_strided_slice %82 {offsets = [0, 0], sizes = [1, 256], strides = [1, 1]} : vector<4x256xf32> to vector<1x256xf32>
    %87 = vector.broadcast %85 : vector<8x1xf32> to vector<8x256xf32>
    %88 = vector.broadcast %86 : vector<1x256xf32> to vector<8x256xf32>
    %89 = arith.mulf %87, %88 : vector<8x256xf32>
    %90 = arith.addf %84, %89 : vector<8x256xf32>
    %91 = vector.extract_strided_slice %80 {offsets = [0, 1], sizes = [8, 1], strides = [1, 1]} : vector<8x4xf32> to vector<8x1xf32>
    %92 = vector.extract_strided_slice %82 {offsets = [1, 0], sizes = [1, 256], strides = [1, 1]} : vector<4x256xf32> to vector<1x256xf32>
    %93 = vector.broadcast %91 : vector<8x1xf32> to vector<8x256xf32>
    %94 = vector.broadcast %92 : vector<1x256xf32> to vector<8x256xf32>
    %95 = arith.mulf %93, %94 : vector<8x256xf32>
    %96 = arith.addf %90, %95 : vector<8x256xf32>
    %97 = vector.extract_strided_slice %80 {offsets = [0, 2], sizes = [8, 1], strides = [1, 1]} : vector<8x4xf32> to vector<8x1xf32>
    %98 = vector.extract_strided_slice %82 {offsets = [2, 0], sizes = [1, 256], strides = [1, 1]} : vector<4x256xf32> to vector<1x256xf32>
    %99 = vector.broadcast %97 : vector<8x1xf32> to vector<8x256xf32>
    %100 = vector.broadcast %98 : vector<1x256xf32> to vector<8x256xf32>
    %101 = arith.mulf %99, %100 : vector<8x256xf32>
    %102 = arith.addf %96, %101 : vector<8x256xf32>
    %103 = vector.extract_strided_slice %80 {offsets = [0, 3], sizes = [8, 1], strides = [1, 1]} : vector<8x4xf32> to vector<8x1xf32>
    %104 = vector.extract_strided_slice %82 {offsets = [3, 0], sizes = [1, 256], strides = [1, 1]} : vector<4x256xf32> to vector<1x256xf32>
    %105 = vector.broadcast %103 : vector<8x1xf32> to vector<8x256xf32>
    %106 = vector.broadcast %104 : vector<1x256xf32> to vector<8x256xf32>
    %107 = arith.mulf %105, %106 : vector<8x256xf32>
    %108 = arith.addf %102, %107 : vector<8x256xf32>
    %c0_45 = arith.constant 0 : index
    %c0_46 = arith.constant 0 : index
    %109 = vector.load %arg6[%c0_45, %c0_46] : memref<16x256xf32, #tpu.memory_space<vmem>>, vector<8x256xf32>
    tpu.vector_store %arg6[%c0_45, %c0_46], %108 {strides = array<i32>} : memref<16x256xf32, #tpu.memory_space<vmem>>, vector<8x256xf32>,
    %110 = vector.extract_strided_slice %79 {offsets = [4, 0], sizes = [4, 256], strides = [1, 1]} : vector<8x256xf32> to vector<4x256xf32>
    %111 = vector.shape_cast %81 : vector<8x1xf32> to vector<8x1xf32>
    %112 = vector.broadcast %111 : vector<8x1xf32> to vector<8x256xf32>
    %113 = vector.extract_strided_slice %80 {offsets = [0, 0], sizes = [8, 1], strides = [1, 1]} : vector<8x4xf32> to vector<8x1xf32>
    %114 = vector.extract_strided_slice %110 {offsets = [0, 0], sizes = [1, 256], strides = [1, 1]} : vector<4x256xf32> to vector<1x256xf32>
    %115 = vector.broadcast %113 : vector<8x1xf32> to vector<8x256xf32>
    %116 = vector.broadcast %114 : vector<1x256xf32> to vector<8x256xf32>
    %117 = arith.mulf %115, %116 : vector<8x256xf32>
    %118 = arith.addf %112, %117 : vector<8x256xf32>
    %119 = vector.extract_strided_slice %80 {offsets = [0, 1], sizes = [8, 1], strides = [1, 1]} : vector<8x4xf32> to vector<8x1xf32>
    %120 = vector.extract_strided_slice %110 {offsets = [1, 0], sizes = [1, 256], strides = [1, 1]} : vector<4x256xf32> to vector<1x256xf32>
    %121 = vector.broadcast %119 : vector<8x1xf32> to vector<8x256xf32>
    %122 = vector.broadcast %120 : vector<1x256xf32> to vector<8x256xf32>
    %123 = arith.mulf %121, %122 : vector<8x256xf32>
    %124 = arith.addf %118, %123 : vector<8x256xf32>
    %125 = vector.extract_strided_slice %80 {offsets = [0, 2], sizes = [8, 1], strides = [1, 1]} : vector<8x4xf32> to vector<8x1xf32>
    %126 = vector.extract_strided_slice %110 {offsets = [2, 0], sizes = [1, 256], strides = [1, 1]} : vector<4x256xf32> to vector<1x256xf32>
    %127 = vector.broadcast %125 : vector<8x1xf32> to vector<8x256xf32>
    %128 = vector.broadcast %126 : vector<1x256xf32> to vector<8x256xf32>
    %129 = arith.mulf %127, %128 : vector<8x256xf32>
    %130 = arith.addf %124, %129 : vector<8x256xf32>
    %131 = vector.extract_strided_slice %80 {offsets = [0, 3], sizes = [8, 1], strides = [1, 1]} : vector<8x4xf32> to vector<8x1xf32>
    %132 = vector.extract_strided_slice %110 {offsets = [3, 0], sizes = [1, 256], strides = [1, 1]} : vector<4x256xf32> to vector<1x256xf32>
    %133 = vector.broadcast %131 : vector<8x1xf32> to vector<8x256xf32>
    %134 = vector.broadcast %132 : vector<1x256xf32> to vector<8x256xf32>
    %135 = arith.mulf %133, %134 : vector<8x256xf32>
    %136 = arith.addf %130, %135 : vector<8x256xf32>
    %c8_47 = arith.constant 8 : index
    %c0_48 = arith.constant 0 : index
    %137 = vector.load %arg6[%c8_47, %c0_48] : memref<16x256xf32, #tpu.memory_space<vmem>>, vector<8x256xf32>
    tpu.vector_store %arg6[%c8_47, %c0_48], %136 {strides = array<i32>} : memref<16x256xf32, #tpu.memory_space<vmem>>, vector<8x256xf32>,
    return
  }
  func.func @transform_0(%arg0: i32) -> (i32, i32) {
    %c0_i32 = arith.constant 0 : i32
    %c0_i32_0 = arith.constant 0 : i32
    %c0_i32_1 = arith.constant 0 : i32
    return %c0_i32, %c0_i32_0 : i32, i32
  }
  func.func @transform_1(%arg0: i32) -> (i32, i32, i32) {
    %c0_i32 = arith.constant 0 : i32
    %c0_i32_0 = arith.constant 0 : i32
    %c0_i32_1 = arith.constant 0 : i32
    %c0_i32_2 = arith.constant 0 : i32
    return %c0_i32, %c0_i32_0, %c0_i32_1 : i32, i32, i32
  }
  func.func @transform_2(%arg0: i32) -> (i32, i32) {
    %c0_i32 = arith.constant 0 : i32
    %c0_i32_0 = arith.constant 0 : i32
    %c0_i32_1 = arith.constant 0 : i32
    return %c0_i32, %c0_i32_0 : i32, i32
  }
  func.func @transform_3(%arg0: i32) -> (i32, i32) {
    %c0_i32 = arith.constant 0 : i32
    %c0_i32_0 = arith.constant 0 : i32
    %c0_i32_1 = arith.constant 0 : i32
    return %c0_i32, %c0_i32_0 : i32, i32
  }
  func.func @transform_4(%arg0: i32) -> (i32, i32) {
    %c0_i32 = arith.constant 0 : i32
    %c0_i32_0 = arith.constant 0 : i32
    %c0_i32_1 = arith.constant 0 : i32
    return %c0_i32, %c0_i32_0 : i32, i32
  }
  func.func @transform_5(%arg0: i32) -> (i32, i32) {
    %c0_i32 = arith.constant 0 : i32
    %c0_i32_0 = arith.constant 0 : i32
    %c0_i32_1 = arith.constant 0 : i32
    return %c0_i32, %c0_i32_0 : i32, i32
  }
}

</mosaic_0001>

<llo_original>
// kernel: depthwise_separable_conv.1
$region0: #{depthwise_separable_conv.1}
  #allocation0 [shape = 'u32[]', space=smem, size = 0x4, offset = 0x4, fixed_abs, tag = 'smem constant byte address 0x4 - core index']
  #allocation1 [shape = 'u32[72,128]{1,0:T(1,128)}', space=vmem, size = 0x9000, scoped, tag = 'internal scratch']
  #allocation2 [shape = 'f32[8,512]{1,0:T(8,128)}', space=vmem, size = 0x4000, scoped, tag = 'scratch operand']
  %s0 = inlined_call_operand.vmem [shape: f32[8,256], index: 0, kind: input, shape index: {}]
  %s1 = inlined_call_operand.vmem [shape: f32[9,8,1], index: 1, kind: input, shape index: {}]
  %s2 = inlined_call_operand.vmem [shape: f32[3,256], index: 2, kind: input, shape index: {}]
  %s3 = inlined_call_operand.vmem [shape: f32[8,4], index: 3, kind: input, shape index: {}]
  %s4 = inlined_call_operand.vmem [shape: f32[8,1], index: 4, kind: input, shape index: {}]
  %s5 = inlined_call_operand.vmem [shape: f32[16,256], index: 5, kind: output, shape index: {}]
  %s6 = sld [smem:[#allocation0]]
  $region30: #{depthwise_separable_conv.1} parent=0
    _
  %s8 = ssub.s32 1, %s6
  %s9 = scalar_select 0, %s8, %s6
  // Predicated region
  $region2: #{depthwise_separable_conv.1} parent=0 // pred_check
    _
  $region3: #{depthwise_separable_conv.1} parent=0 // pred_check_branch
    %11 = sbr.rel (0) target = $region5
  $region4: #{depthwise_separable_conv.1} parent=0 // pred_region
    _
  $region5: #{depthwise_separable_conv.1} parent=0 // pred_fallthru
    _
  // Predicated region
  $region6: #{depthwise_separable_conv.1} parent=0 // pred_check
    _
  $region7: #{depthwise_separable_conv.1} parent=0 // pred_check_branch
    %13 = sbr.rel (0) target = $region9
  $region8: #{depthwise_separable_conv.1} parent=0 // pred_region
    _
  $region9: #{depthwise_separable_conv.1} parent=0 // pred_fallthru
    _
  // Predicated region
  $region10: #{depthwise_separable_conv.1} parent=0 // pred_check
    _
  $region11: #{depthwise_separable_conv.1} parent=0 // pred_check_branch
    %15 = sbr.rel (0) target = $region13
  $region12: #{depthwise_separable_conv.1} parent=0 // pred_region
    _
  $region13: #{depthwise_separable_conv.1} parent=0 // pred_fallthru
    _
  // Predicated region
  $region14: #{depthwise_separable_conv.1} parent=0 // pred_check
    _
  $region15: #{depthwise_separable_conv.1} parent=0 // pred_check_branch
    %17 = sbr.rel (0) target = $region17
  $region16: #{depthwise_separable_conv.1} parent=0 // pred_region
    _
  $region17: #{depthwise_separable_conv.1} parent=0 // pred_fallthru
    _
  // Predicated region
  $region18: #{depthwise_separable_conv.1} parent=0 // pred_check
    _
  $region19: #{depthwise_separable_conv.1} parent=0 // pred_check_branch
    %19 = sbr.rel (0) target = $region21
  $region20: #{depthwise_separable_conv.1} parent=0 // pred_region
    _
  $region21: #{depthwise_separable_conv.1} parent=0 // pred_fallthru
    _
  %20 = vst [vmem:[#allocation2] sm:$0xff] 0.0
  %21 = vst [vmem:[#allocation2 + $0x18] sm:$0xff] 0.0
  %v22 = vld [vmem:[%s0] sm:$0xff]
  %v23 = vld [vmem:[%s0 + $0x8] sm:$0xff]
  %24 = vst [vmem:[#allocation2 + $0x8] sm:$0xff] %v22
  %25 = vst [vmem:[#allocation2 + $0x10] sm:$0xff] %v23
  %v26 = vld [vmem:[%s2] ss:$4 sm:$0x3]
  %s27 = scalar_lea.vmem %s2, 1
  %v28 = vld [vmem:[%s27] ss:$4 sm:$0x3]
  %s29 = scalar_lea.vmem %s2, 2
  %v30 = vld [vmem:[%s29] ss:$4 sm:$0x3]
  %v31 = vld [vmem:[#allocation2] sm:$0xff]
  %v32 = vld [vmem:[#allocation2 + $0x8] sm:$0xff]
  %v33 = vld [vmem:[#allocation2 + $0x10] sm:$0xff]
  %v35 = vperm.slane %v26, 0
  %v36 = vperm.slane %v26, 1
  %37 = vrot.lane.b32.xlu0 %v35, 111
  %v38 = vpop.permute.xlu0 %37
  %39 = vrot.lane.b32.xlu0 %v36, 111
  %v40 = vpop.permute.xlu0 %39
  %vm41 = vcmask 908288
  %v42 = vsel %vm41, %v38, %v40
  %v46 = vmul.f32 %v31, %v38
  %v47 = vmul.f32 %v32, %v42
  %v48 = vmul.f32 %v33, %v40
  %v49 = vld [vmem:[%s1] sm:$0xff]
  %51 = vset.pattern.permute.xlu0 0
  %52 = vperm.xlu0 %51, %v49
  %v53 = vpop.permute.xlu0 %52
  %v55 = vmul.f32 %v46, %v53
  %v56 = vmul.f32 %v47, %v53
  %v57 = vmul.f32 %v48, %v53
  %v59 = vperm.slane %v28, 0
  %v60 = vperm.slane %v28, 1
  %63 = vrot.lane.b32.xlu0 %v59, 112
  %v64 = vpop.permute.xlu0 %63
  %65 = vrot.lane.b32.xlu0 %v60, 112
  %v66 = vpop.permute.xlu0 %65
  %vm67 = vcmask 916480
  %v68 = vsel %vm67, %v64, %v66
  %v72 = vmul.f32 %v31, %v64
  %v73 = vmul.f32 %v32, %v68
  %v74 = vmul.f32 %v33, %v66
  %s75 = scalar_lea.vmem %s1, 8
  %v76 = vld [vmem:[%s75] sm:$0xff]
  %78 = vset.pattern.permute.xlu0 0
  %79 = vperm.xlu0 %78, %v76
  %v80 = vpop.permute.xlu0 %79
  %v82 = vmul.f32 %v72, %v80
  %v83 = vmul.f32 %v73, %v80
  %v84 = vmul.f32 %v74, %v80
  %88 = vrot.lane.b32.xlu0 %v82, 127
  %v89 = vpop.permute.xlu0 %88
  %90 = vrot.lane.b32.xlu0 %v83, 127
  %v91 = vpop.permute.xlu0 %90
  %92 = vrot.lane.b32.xlu0 %v84, 127
  %v93 = vpop.permute.xlu0 %92
  %vm94 = vcmask 1039360
  %v95 = vsel %vm94, %v89, %v91
  %v96 = vsel %vm94, %v91, %v93
  %v100 = vadd.f32 %v55, %v95
  %v101 = vadd.f32 %v56, %v96
  %v102 = vadd.f32 %v57, %v93
  %v104 = vperm.slane %v30, 0
  %v105 = vperm.slane %v30, 1
  %106 = vrot.lane.b32.xlu0 %v104, 113
  %v107 = vpop.permute.xlu0 %106
  %108 = vrot.lane.b32.xlu0 %v105, 113
  %v109 = vpop.permute.xlu0 %108
  %vm110 = vcmask 924672
  %v111 = vsel %vm110, %v107, %v109
  %v115 = vmul.f32 %v31, %v107
  %v116 = vmul.f32 %v32, %v111
  %v117 = vmul.f32 %v33, %v109
  %s118 = scalar_lea.vmem %s1, 16
  %v119 = vld [vmem:[%s118] sm:$0xff]
  %121 = vset.pattern.permute.xlu0 0
  %122 = vperm.xlu0 %121, %v119
  %v123 = vpop.permute.xlu0 %122
  %v125 = vmul.f32 %v115, %v123
  %v126 = vmul.f32 %v116, %v123
  %v127 = vmul.f32 %v117, %v123
  %131 = vrot.lane.b32.xlu0 %v125, 126
  %v132 = vpop.permute.xlu0 %131
  %133 = vrot.lane.b32.xlu0 %v126, 126
  %v134 = vpop.permute.xlu0 %133
  %135 = vrot.lane.b32.xlu0 %v127, 126
  %v136 = vpop.permute.xlu0 %135
  %vm137 = vcmask 1031168
  %v138 = vsel %vm137, %v132, %v134
  %v139 = vsel %vm137, %v134, %v136
  %v143 = vadd.f32 %v100, %v138
  %v144 = vadd.f32 %v101, %v139
  %v145 = vadd.f32 %v102, %v136
  %146 = vrot.lane.b32.xlu0 %v35, 127
  %v147 = vpop.permute.xlu0 %146
  %148 = vrot.lane.b32.xlu0 %v36, 127
  %v149 = vpop.permute.xlu0 %148
  %v150 = vsel %vm94, %v147, %v149
  %v154 = vmul.f32 %v31, %v147
  %v155 = vmul.f32 %v32, %v150
  %v156 = vmul.f32 %v33, %v149
  %s157 = scalar_lea.vmem %s1, 24
  %v158 = vld [vmem:[%s157] sm:$0xff]
  %160 = vset.pattern.permute.xlu0 0
  %161 = vperm.xlu0 %160, %v158
  %v162 = vpop.permute.xlu0 %161
  %v164 = vmul.f32 %v154, %v162
  %v165 = vmul.f32 %v155, %v162
  %v166 = vmul.f32 %v156, %v162
  %170 = vrot.lane.b32.xlu0 %v164, 112
  %v171 = vpop.permute.xlu0 %170
  %172 = vrot.lane.b32.xlu0 %v165, 112
  %v173 = vpop.permute.xlu0 %172
  %174 = vrot.lane.b32.xlu0 %v166, 112
  %v175 = vpop.permute.xlu0 %174
  %v176 = vsel %vm67, %v171, %v173
  %v177 = vsel %vm67, %v173, %v175
  %v181 = vadd.f32 %v143, %v176
  %v182 = vadd.f32 %v144, %v177
  %v183 = vadd.f32 %v145, %v175
  %v184 = vmul.f32 %v32, %v59
  %v185 = vmul.f32 %v33, %v60
  %s186 = scalar_lea.vmem %s1, 32
  %v187 = vld [vmem:[%s186] sm:$0xff]
  %189 = vset.pattern.permute.xlu0 0
  %190 = vperm.xlu0 %189, %v187
  %v191 = vpop.permute.xlu0 %190
  %v193 = vmul.f32 %v184, %v191
  %v194 = vmul.f32 %v185, %v191
  %197 = vrot.lane.b32.xlu0 %v193, 111
  %v198 = vpop.permute.xlu0 %197
  %199 = vrot.lane.b32.xlu0 %v194, 111
  %v200 = vpop.permute.xlu0 %199
  %v201 = vsel %vm41, %v198, %v200
  %v205 = vadd.f32 %v181, %v198
  %v206 = vadd.f32 %v182, %v201
  %v207 = vadd.f32 %v183, %v200
  %v208 = vld [vmem:[#allocation2 + $0x8] sm:$0xff]
  %v209 = vld [vmem:[#allocation2 + $0x10] sm:$0xff]
  %v210 = vld [vmem:[#allocation2 + $0x18] sm:$0xff]
  %211 = vrot.lane.b32.xlu0 %v104, 1
  %v212 = vpop.permute.xlu0 %211
  %213 = vrot.lane.b32.xlu0 %v105, 1
  %v214 = vpop.permute.xlu0 %213
  %vm215 = vcmask 7168
  %v216 = vsel %vm215, %v212, %v214
  %v220 = vmul.f32 %v208, %v212
  %v221 = vmul.f32 %v209, %v216
  %v222 = vmul.f32 %v210, %v214
  %s223 = scalar_lea.vmem %s1, 40
  %v224 = vld [vmem:[%s223] sm:$0xff]
  %226 = vset.pattern.permute.xlu0 0
  %227 = vperm.xlu0 %226, %v224
  %v228 = vpop.permute.xlu0 %227
  %v230 = vmul.f32 %v220, %v228
  %v231 = vmul.f32 %v221, %v228
  %v232 = vmul.f32 %v222, %v228
  %236 = vrot.lane.b32.xlu0 %v230, 110
  %v237 = vpop.permute.xlu0 %236
  %238 = vrot.lane.b32.xlu0 %v231, 110
  %v239 = vpop.permute.xlu0 %238
  %240 = vrot.lane.b32.xlu0 %v232, 110
  %v241 = vpop.permute.xlu0 %240
  %vm242 = vcmask 900096
  %v243 = vsel %vm242, %v237, %v239
  %v244 = vsel %vm242, %v239, %v241
  %v248 = vadd.f32 %v205, %v237
  %v249 = vadd.f32 %v206, %v243
  %v250 = vadd.f32 %v207, %v244
  %251 = vrot.lane.b32.xlu0 %v35, 15
  %v252 = vpop.permute.xlu0 %251
  %253 = vrot.lane.b32.xlu0 %v36, 15
  %v254 = vpop.permute.xlu0 %253
  %vm255 = vcmask 121856
  %v256 = vsel %vm255, %v252, %v254
  %v260 = vmul.f32 %v208, %v252
  %v261 = vmul.f32 %v209, %v256
  %v262 = vmul.f32 %v210, %v254
  %s263 = scalar_lea.vmem %s1, 48
  %v264 = vld [vmem:[%s263] sm:$0xff]
  %266 = vset.pattern.permute.xlu0 0
  %267 = vperm.xlu0 %266, %v264
  %v268 = vpop.permute.xlu0 %267
  %v270 = vmul.f32 %v260, %v268
  %v271 = vmul.f32 %v261, %v268
  %v272 = vmul.f32 %v262, %v268
  %276 = vrot.lane.b32.xlu0 %v270, 96
  %v277 = vpop.permute.xlu0 %276
  %278 = vrot.lane.b32.xlu0 %v271, 96
  %v279 = vpop.permute.xlu0 %278
  %280 = vrot.lane.b32.xlu0 %v272, 96
  %v281 = vpop.permute.xlu0 %280
  %vm282 = vcmask 785408
  %v283 = vsel %vm282, %v277, %v279
  %v284 = vsel %vm282, %v279, %v281
  %v288 = vadd.f32 %v248, %v277
  %v289 = vadd.f32 %v249, %v283
  %v290 = vadd.f32 %v250, %v284
  %291 = vrot.lane.b32.xlu0 %v59, 16
  %v292 = vpop.permute.xlu0 %291
  %293 = vrot.lane.b32.xlu0 %v60, 16
  %v294 = vpop.permute.xlu0 %293
  %vm295 = vcmask 130048
  %v296 = vsel %vm295, %v292, %v294
  %v300 = vmul.f32 %v208, %v292
  %v301 = vmul.f32 %v209, %v296
  %v302 = vmul.f32 %v210, %v294
  %s303 = scalar_lea.vmem %s1, 56
  %v304 = vld [vmem:[%s303] sm:$0xff]
  %306 = vset.pattern.permute.xlu0 0
  %307 = vperm.xlu0 %306, %v304
  %v308 = vpop.permute.xlu0 %307
  %v310 = vmul.f32 %v300, %v308
  %v311 = vmul.f32 %v301, %v308
  %v312 = vmul.f32 %v302, %v308
  %316 = vrot.lane.b32.xlu0 %v310, 95
  %v317 = vpop.permute.xlu0 %316
  %318 = vrot.lane.b32.xlu0 %v311, 95
  %v319 = vpop.permute.xlu0 %318
  %320 = vrot.lane.b32.xlu0 %v312, 95
  %v321 = vpop.permute.xlu0 %320
  %vm322 = vcmask 777216
  %v323 = vsel %vm322, %v317, %v319
  %v324 = vsel %vm322, %v319, %v321
  %v328 = vadd.f32 %v288, %v317
  %v329 = vadd.f32 %v289, %v323
  %v330 = vadd.f32 %v290, %v324
  %331 = vrot.lane.b32.xlu0 %v104, 17
  %v332 = vpop.permute.xlu0 %331
  %333 = vrot.lane.b32.xlu0 %v105, 17
  %v334 = vpop.permute.xlu0 %333
  %vm335 = vcmask 138240
  %v336 = vsel %vm335, %v332, %v334
  %v340 = vmul.f32 %v208, %v332
  %v341 = vmul.f32 %v209, %v336
  %v342 = vmul.f32 %v210, %v334
  %s343 = scalar_lea.vmem %s1, 64
  %v344 = vld [vmem:[%s343] sm:$0xff]
  %346 = vset.pattern.permute.xlu0 0
  %347 = vperm.xlu0 %346, %v344
  %v348 = vpop.permute.xlu0 %347
  %v350 = vmul.f32 %v340, %v348
  %v351 = vmul.f32 %v341, %v348
  %v352 = vmul.f32 %v342, %v348
  %356 = vrot.lane.b32.xlu0 %v350, 94
  %v357 = vpop.permute.xlu0 %356
  %358 = vrot.lane.b32.xlu0 %v351, 94
  %v359 = vpop.permute.xlu0 %358
  %360 = vrot.lane.b32.xlu0 %v352, 94
  %v361 = vpop.permute.xlu0 %360
  %vm362 = vcmask 769024
  %v363 = vsel %vm362, %v357, %v359
  %v364 = vsel %vm362, %v359, %v361
  %v368 = vadd.f32 %v328, %v357
  %v369 = vadd.f32 %v329, %v363
  %v370 = vadd.f32 %v330, %v364
  %v371 = vld [vmem:[%s3] sm:$0xff]
  %v372 = vld [vmem:[%s4] sm:$0xff]
  %374 = vset.pattern.permute.xlu0 0
  %375 = vperm.xlu0 %374, %v372
  %v376 = vpop.permute.xlu0 %375
  %379 = vset.pattern.permute.xlu0 0
  %380 = vperm.xlu0 %379, %v371
  %v381 = vpop.permute.xlu0 %380
  %v383 = vperm.slane %v368, 0
  %v384 = vperm.slane %v369, 0
  %v385 = vperm.slane %v370, 0
  %v386 = vmul.f32 %v381, %v383
  %v387 = vmul.f32 %v381, %v384
  %v388 = vmul.f32 %v381, %v385
  %v389 = vadd.f32 %v376, %v386
  %v390 = vadd.f32 %v376, %v387
  %v391 = vadd.f32 %v376, %v388
  %392 = vset.pattern.permute.xlu0 1
  %393 = vperm.xlu0 %392, %v371
  %v394 = vpop.permute.xlu0 %393
  %v396 = vperm.slane %v368, 1
  %v397 = vperm.slane %v369, 1
  %v398 = vperm.slane %v370, 1
  %v399 = vmul.f32 %v394, %v396
  %v400 = vmul.f32 %v394, %v397
  %v401 = vmul.f32 %v394, %v398
  %v402 = vadd.f32 %v389, %v399
  %v403 = vadd.f32 %v390, %v400
  %v404 = vadd.f32 %v391, %v401
  %405 = vset.pattern.permute.xlu0 2
  %406 = vperm.xlu0 %405, %v371
  %v407 = vpop.permute.xlu0 %406
  %v409 = vperm.slane %v368, 2
  %v410 = vperm.slane %v369, 2
  %v411 = vperm.slane %v370, 2
  %v412 = vmul.f32 %v407, %v409
  %v413 = vmul.f32 %v407, %v410
  %v414 = vmul.f32 %v407, %v411
  %v415 = vadd.f32 %v402, %v412
  %v416 = vadd.f32 %v403, %v413
  %v417 = vadd.f32 %v404, %v414
  %418 = vset.pattern.permute.xlu0 3
  %419 = vperm.xlu0 %418, %v371
  %v420 = vpop.permute.xlu0 %419
  %v422 = vperm.slane %v368, 3
  %v423 = vperm.slane %v369, 3
  %v424 = vperm.slane %v370, 3
  %v425 = vmul.f32 %v420, %v422
  %v426 = vmul.f32 %v420, %v423
  %v427 = vmul.f32 %v420, %v424
  %v428 = vadd.f32 %v415, %v425
  %v429 = vadd.f32 %v416, %v426
  %v430 = vadd.f32 %v417, %v427
  %434 = vrot.lane.b32.xlu0 %v428, 17
  %v435 = vpop.permute.xlu0 %434
  %436 = vrot.lane.b32.xlu0 %v429, 17
  %v437 = vpop.permute.xlu0 %436
  %438 = vrot.lane.b32.xlu0 %v430, 17
  %v439 = vpop.permute.xlu0 %438
  %v440 = vsel %vm335, %v435, %v437
  %v441 = vsel %vm335, %v437, %v439
  %444 = vst [vmem:[%s5] sm:$0xff] %v440
  %445 = vst [vmem:[%s5 + $0x8] sm:$0xff] %v441
  %v446 = vperm.slane %v368, 4
  %v447 = vperm.slane %v369, 4
  %v448 = vperm.slane %v370, 4
  %v449 = vmul.f32 %v381, %v446
  %v450 = vmul.f32 %v381, %v447
  %v451 = vmul.f32 %v381, %v448
  %v452 = vadd.f32 %v376, %v449
  %v453 = vadd.f32 %v376, %v450
  %v454 = vadd.f32 %v376, %v451
  %v455 = vperm.slane %v368, 5
  %v456 = vperm.slane %v369, 5
  %v457 = vperm.slane %v370, 5
  %v458 = vmul.f32 %v394, %v455
  %v459 = vmul.f32 %v394, %v456
  %v460 = vmul.f32 %v394, %v457
  %v461 = vadd.f32 %v452, %v458
  %v462 = vadd.f32 %v453, %v459
  %v463 = vadd.f32 %v454, %v460
  %v464 = vperm.slane %v368, 6
  %v465 = vperm.slane %v369, 6
  %v466 = vperm.slane %v370, 6
  %v467 = vmul.f32 %v407, %v464
  %v468 = vmul.f32 %v407, %v465
  %v469 = vmul.f32 %v407, %v466
  %v470 = vadd.f32 %v461, %v467
  %v471 = vadd.f32 %v462, %v468
  %v472 = vadd.f32 %v463, %v469
  %v473 = vperm.slane %v368, 7
  %v474 = vperm.slane %v369, 7
  %v475 = vperm.slane %v370, 7
  %v476 = vmul.f32 %v420, %v473
  %v477 = vmul.f32 %v420, %v474
  %v478 = vmul.f32 %v420, %v475
  %v479 = vadd.f32 %v470, %v476
  %v480 = vadd.f32 %v471, %v477
  %v481 = vadd.f32 %v472, %v478
  %485 = vrot.lane.b32.xlu0 %v479, 17
  %v486 = vpop.permute.xlu0 %485
  %487 = vrot.lane.b32.xlu0 %v480, 17
  %v488 = vpop.permute.xlu0 %487
  %489 = vrot.lane.b32.xlu0 %v481, 17
  %v490 = vpop.permute.xlu0 %489
  %v491 = vsel %vm335, %v486, %v488
  %v492 = vsel %vm335, %v488, %v490
  %495 = vst [vmem:[%s5 + $0x10] sm:$0xff] %v491
  %496 = vst [vmem:[%s5 + $0x18] sm:$0xff] %v492
  // Predicated region
  $region22: #{depthwise_separable_conv.1} parent=0 // pred_check
    _
  $region23: #{depthwise_separable_conv.1} parent=0 // pred_check_branch
    %498 = sbr.rel (0) target = $region25
  $region24: #{depthwise_separable_conv.1} parent=0 // pred_region
    _
  $region25: #{depthwise_separable_conv.1} parent=0 // pred_fallthru
    _
  // Predicated region
  $region26: #{depthwise_separable_conv.1} parent=0 // pred_check
    _
  $region27: #{depthwise_separable_conv.1} parent=0 // pred_check_branch
    %500 = sbr.rel (0) target = $region29
  $region28: #{depthwise_separable_conv.1} parent=0 // pred_region
    _
  $region29: #{depthwise_separable_conv.1} parent=0 // pred_fallthru
    _

</llo_original>
